<compile_context>
chip_gen: v7x
topology: tpu7x:2x2x1
jax: 0.10.0
libtpu: 0.0.40
codegen_flags: <defaults>
</compile_context>

<pallas_src>
import jax
import jax.numpy as jnp
from jax import lax
from jax.experimental import pallas as pl
from jax.experimental.pallas import tpu as pltpu

# ---- synthetic "rec" configuration (deterministic, small) -------------------
ITEMS_NUM = 64
EMB_DIM = 32
MAX_EMB_NORM = 1.0          # rec.max_emb_norm
BATCH = 2
SEQ = 8
_EPS = 1e-7                  # matches torch.renorm eps


def _only_last_item_kernel(ids_ref, emb_ref, wt_ref, b_ref, o_ref):
    """ids_ref: VMEM (B, 1)  int32 last-item id per sequence
       emb_ref: VMEM (ITEMS_NUM, D) embedding table
       wt_ref:  VMEM (D_in, D_out) Linear weight, PRE-TRANSPOSED (= torch W.T)
       b_ref:   VMEM (1, D_out) Linear bias, pre-shaped 2-D
       o_ref:   VMEM (B, D_out) output."""
    B = o_ref.shape[0]
    n_items = emb_ref.shape[0]

    # Defensive clamp: with the one-hot gather an OOB id can't read stray VMEM,
    # but clipping keeps the behavior deterministic (maps to the last row).
    ids = jnp.clip(ids_ref[...], 0, n_items - 1)                     # (B, 1)

    # One-hot MXU gather (replaces dynamic-sublane slices + concatenate):
    # sel[b, i] = 1.0 iff i == last_id[b]; z = sel @ table.
    item_iota = lax.broadcasted_iota(jnp.int32, (B, n_items), 1)     # (B, N)
    sel = jnp.where(item_iota == ids, 1.0, 0.0).astype(jnp.float32)  # (B, N)
    z = jnp.dot(sel, emb_ref[...], preferred_element_type=jnp.float32)  # (B, D)

    # nn.Embedding(max_norm=...) semantics: looked-up rows with ||row||_2 >
    # max_norm are rescaled to max_norm (torch.renorm eps placement kept;
    # exact sqrt + divide -- do NOT substitute approx reciprocal/rsqrt).
    norm = jnp.sqrt(jnp.sum(z * z, axis=-1, keepdims=True))
    scale = jnp.where(norm > MAX_EMB_NORM, MAX_EMB_NORM / (norm + _EPS), 1.0)
    z = z * scale

    # Linear: y = z @ W_t + b.  W_t is already (D_in, D_out): straight MXU
    # contraction, no in-kernel transpose / transposed weight staging.
    y = jnp.dot(z, wt_ref[...], preferred_element_type=jnp.float32)
    y = y + b_ref[...]                                               # (1, D_out) broadcast

    # activation = tanh (EUP)
    o_ref[...] = jnp.tanh(y).astype(o_ref.dtype)


def only_last_item_forward(x, embed_table, w_t, b2d):
    """x: (B, S) int32 item indices.
       embed_table: (ITEMS_NUM, D) float32.
       w_t: (D_in, D_out) float32 -- Linear weight pre-transposed (torch W.T).
       b2d: (1, D_out) float32 bias.
    Returns (B, D_out) float32."""
    B = x.shape[0]
    D_out = w_t.shape[1]
    # Only the last-item ids enter the kernel (review: shrink the scalar input).
    last_ids = x[:, -1:].astype(jnp.int32)                           # (B, 1)
    return pl.pallas_call(
        _only_last_item_kernel,
        out_shape=jax.ShapeDtypeStruct((B, D_out), jnp.float32),
        in_specs=[
            pl.BlockSpec(memory_space=pltpu.MemorySpace.VMEM),   # last-item ids
            pl.BlockSpec(memory_space=pltpu.MemorySpace.VMEM),   # embedding table
            pl.BlockSpec(memory_space=pltpu.MemorySpace.VMEM),   # W_t (D_in, D_out)
            pl.BlockSpec(memory_space=pltpu.MemorySpace.VMEM),   # bias (1, D_out)
        ],
        out_specs=pl.BlockSpec(memory_space=pltpu.MemorySpace.VMEM),
    )(last_ids, embed_table, w_t, b2d)


if __name__ == "__main__":
    key = jax.random.PRNGKey(0)
    k_emb, k_w, k_b, k_x = jax.random.split(key, 4)

    # deterministic synthetic parameters (shapes from module __init__)
    embed_table = jax.random.normal(k_emb, (ITEMS_NUM, EMB_DIM), jnp.float32)
    # torch layout weight (out_features, in_features) ...
    w_torch = jax.random.normal(k_w, (EMB_DIM, EMB_DIM), jnp.float32) * (1.0 / jnp.sqrt(EMB_DIM))
    # ... pre-transposed ONCE at parameter-init time (constant layout choice).
    w_t = jnp.asarray(w_torch.T)                                     # (D_in, D_out)
    b = jax.random.normal(k_b, (EMB_DIM,), jnp.float32) * 0.01
    b2d = b.reshape(1, EMB_DIM)                                      # pre-shaped bias

    # input: (B, S) item indices
    x = jax.random.randint(k_x, (BATCH, SEQ), 0, ITEMS_NUM, dtype=jnp.int32)

    out = only_last_item_forward(x, embed_table, w_t, b2d)
    jax.block_until_ready(out)

    # reference check in plain JAX (matches the PyTorch forward semantics)
    z_ref = jnp.take(embed_table, x[:, -1], axis=0)
    n = jnp.linalg.norm(z_ref, axis=-1, keepdims=True)
    z_ref = z_ref * jnp.where(n > MAX_EMB_NORM, MAX_EMB_NORM / (n + _EPS), 1.0)
    ref = jnp.tanh(z_ref @ w_torch.T + b)
    assert jnp.allclose(out, ref, atol=1e-5, rtol=1e-5)

    print("KERNEL_OK")
</pallas_src>

<mosaic_0001>
module attributes {stable_mosaic.version = 11 : i64} {
  func.func @_only_last_item_kernel(%arg0: memref<2x1xi32, #tpu.memory_space<vmem>>, %arg1: memref<64x32xf32, #tpu.memory_space<vmem>>, %arg2: memref<32x32xf32, #tpu.memory_space<vmem>>, %arg3: memref<1x32xf32, #tpu.memory_space<vmem>>, %arg4: memref<2x32xf32, #tpu.memory_space<vmem>>) attributes {dimension_semantics = [], scalar_prefetch = 0 : i64, scratch_operands = 0 : i64, tpu.core_type = #tpu.core_type<tc>} {
    %c0 = arith.constant 0 : index
    %c0_0 = arith.constant 0 : index
    %0 = vector.load %arg0[%c0, %c0_0] : memref<2x1xi32, #tpu.memory_space<vmem>>, vector<2x1xi32>
    %c0_i32 = arith.constant 0 : i32
    %c63_i32 = arith.constant 63 : i32
    %1 = vector.broadcast %c0_i32 : i32 to vector<2x1xi32>
    %2 = arith.maxsi %1, %0 : vector<2x1xi32>
    %3 = vector.broadcast %c63_i32 : i32 to vector<2x1xi32>
    %4 = arith.minsi %3, %2 : vector<2x1xi32>
    %5 = tpu.iota {dimensions = array<i32: 1>} : vector<2x64xi32>
    %6 = vector.broadcast %4 : vector<2x1xi32> to vector<2x64xi32>
    %7 = arith.cmpi eq, %5, %6 : vector<2x64xi32>
    %cst = arith.constant 1.000000e+00 : f32
    %cst_1 = arith.constant 0.000000e+00 : f32
    %8 = vector.broadcast %cst : f32 to vector<2x64xf32>
    %9 = vector.broadcast %cst_1 : f32 to vector<2x64xf32>
    %10 = arith.select %7, %8, %9 : vector<2x64xi1>, vector<2x64xf32>
    %c0_2 = arith.constant 0 : index
    %c0_3 = arith.constant 0 : index
    %11 = vector.load %arg1[%c0_2, %c0_3] : memref<64x32xf32, #tpu.memory_space<vmem>>, vector<64x32xf32>
    %cst_4 = arith.constant dense<0.000000e+00> : vector<2x32xf32>
    %12 = tpu.matmul %10, %11, %cst_4 {dimension_numbers = #tpu.dot_dimension_numbers<[1], [0], [0], [1], [0, 0, 1, 1], [], []>} : vector<2x64xf32>, vector<64x32xf32>, vector<2x32xf32> -> vector<2x32xf32>
    %13 = arith.mulf %12, %12 : vector<2x32xf32>
    %cst_5 = arith.constant dense<0.000000e+00> : vector<2xf32>
    %14 = vector.multi_reduction <add>, %13, %cst_5 [1] : vector<2x32xf32> to vector<2xf32>
    %15 = vector.shape_cast %14 : vector<2xf32> to vector<2x1xf32>
    %16 = math.sqrt %15 : vector<2x1xf32>
    %cst_6 = arith.constant 1.000000e+00 : f32
    %17 = vector.broadcast %cst_6 : f32 to vector<2x1xf32>
    %18 = arith.cmpf ogt, %16, %17 : vector<2x1xf32>
    %cst_7 = arith.constant 1.000000e-07 : f32
    %19 = vector.broadcast %cst_7 : f32 to vector<2x1xf32>
    %20 = arith.addf %16, %19 : vector<2x1xf32>
    %cst_8 = arith.constant 1.000000e+00 : f32
    %21 = vector.broadcast %cst_8 : f32 to vector<2x1xf32>
    %22 = arith.divf %21, %20 : vector<2x1xf32>
    %cst_9 = arith.constant 1.000000e+00 : f32
    %23 = vector.broadcast %cst_9 : f32 to vector<2x1xf32>
    %24 = arith.select %18, %22, %23 : vector<2x1xi1>, vector<2x1xf32>
    %25 = vector.broadcast %24 : vector<2x1xf32> to vector<2x32xf32>
    %26 = arith.mulf %12, %25 : vector<2x32xf32>
    %c0_10 = arith.constant 0 : index
    %c0_11 = arith.constant 0 : index
    %27 = vector.load %arg2[%c0_10, %c0_11] : memref<32x32xf32, #tpu.memory_space<vmem>>, vector<32x32xf32>
    %cst_12 = arith.constant dense<0.000000e+00> : vector<2x32xf32>
    %28 = tpu.matmul %26, %27, %cst_12 {dimension_numbers = #tpu.dot_dimension_numbers<[1], [0], [0], [1], [0, 0, 1, 1], [], []>} : vector<2x32xf32>, vector<32x32xf32>, vector<2x32xf32> -> vector<2x32xf32>
    %c0_13 = arith.constant 0 : index
    %c0_14 = arith.constant 0 : index
    %29 = vector.load %arg3[%c0_13, %c0_14] : memref<1x32xf32, #tpu.memory_space<vmem>>, vector<1x32xf32>
    %30 = vector.broadcast %29 : vector<1x32xf32> to vector<2x32xf32>
    %31 = arith.addf %28, %30 : vector<2x32xf32>
    %32 = math.tanh %31 : vector<2x32xf32>
    %c0_15 = arith.constant 0 : index
    %c0_16 = arith.constant 0 : index
    %33 = vector.load %arg4[%c0_15, %c0_16] : memref<2x32xf32, #tpu.memory_space<vmem>>, vector<2x32xf32>
    tpu.vector_store %arg4[%c0_15, %c0_16], %32 {strides = array<i32>} : memref<2x32xf32, #tpu.memory_space<vmem>>, vector<2x32xf32>,
    return
  }
}

</mosaic_0001>

<llo_original>
// kernel: tpu_custom_call.1
$region0: #{tpu_custom_call.1}
  #allocation0 [shape = 'u32[]', space=smem, size = 0x4, offset = 0x4, fixed_abs, tag = 'smem constant byte address 0x4 - core index']
  #allocation1 [shape = 'u32[144,128]{1,0:T(1,128)}', space=vmem, size = 0x12000, scoped, tag = 'internal scratch']
  %s0 = inlined_call_operand.vmem [shape: s32[2,1], index: 0, kind: input, shape index: {}]
  %s1 = inlined_call_operand.vmem [shape: f32[64,32], index: 1, kind: input, shape index: {}]
  %s2 = inlined_call_operand.vmem [shape: f32[32,32], index: 2, kind: input, shape index: {}]
  %s3 = inlined_call_operand.vmem [shape: f32[1,32], index: 3, kind: input, shape index: {}]
  %s4 = inlined_call_operand.hbm [shape: f32[2,32], index: 4, kind: output, shape index: {}]
  %s5 = sld [smem:[#allocation0]]
  $region26: #{tpu_custom_call.1} parent=0
    _
  %s7 = ssub.s32 1, %s5
  %s8 = scalar_select 0, %s7, %s5
  $region1: #{tpu_custom_call.1} parent=0
    #allocation2 [shape = 'u8[1024]{0}', space=vmem, size = 0x400, scoped, tag = 'output window, operand 0, single buffered']
    #allocation3 [shape = 's32[1]{0}', space=sflag, size = 0x4, scoped, tag = 'scoped memory for tpu_custom_call.1']
    %9 = vsyncpa [#allocation3], 0
    // Predicated region
    $region2: #{tpu_custom_call.1} parent=1 // pred_check
      _
    $region3: #{tpu_custom_call.1} parent=1 // pred_check_branch
      %11 = sbr.rel (0) target = $region5
    $region4: #{tpu_custom_call.1} parent=1 // pred_region
      _
    $region5: #{tpu_custom_call.1} parent=1 // pred_fallthru
      _
    // Predicated region
    $region6: #{tpu_custom_call.1} parent=1 // pred_check
      _
    $region7: #{tpu_custom_call.1} parent=1 // pred_check_branch
      %13 = sbr.rel (0) target = $region9
    $region8: #{tpu_custom_call.1} parent=1 // pred_region
      _
    $region9: #{tpu_custom_call.1} parent=1 // pred_fallthru
      _
    // Predicated region
    $region10: #{tpu_custom_call.1} parent=1 // pred_check
      _
    $region11: #{tpu_custom_call.1} parent=1 // pred_check_branch
      %15 = sbr.rel (0) target = $region13
    $region12: #{tpu_custom_call.1} parent=1 // pred_region
      _
    $region13: #{tpu_custom_call.1} parent=1 // pred_fallthru
      _
    // Predicated region
    $region14: #{tpu_custom_call.1} parent=1 // pred_check
      _
    $region15: #{tpu_custom_call.1} parent=1 // pred_check_branch
      %17 = sbr.rel (0) target = $region17
    $region16: #{tpu_custom_call.1} parent=1 // pred_region
      _
    $region17: #{tpu_custom_call.1} parent=1 // pred_fallthru
      _
    %v18 = vld [vmem:[%s0] sm:$0x3]
    %vm19 = vcmp.gt.s32.totalorder %v18, 0
    %v20 = vsel %vm19, %v18, 0
    %vm21 = vcmp.lt.s32.totalorder %v20, 63
    %v22 = vsel %vm21, %v20, 63
    %v23 = vlaneseq
    %v24 = vand.u32 %v23, 127
    %25 = vset.pattern.permute.xlu0 0
    %26 = vperm.xlu0 %25, %v22
    %v27 = vpop.permute.xlu0 %26
    %vm28 = vcmp.eq.s32.totalorder %v24, %v27
    %v29 = vsel %vm28, 1.0, 0.0
    %v30 = vld [vmem:[%s1] sm:$0xff]
    %v31 = vld [vmem:[%s1 + $0x8] sm:$0xff]
    %v32 = vld [vmem:[%s1 + $0x10] sm:$0xff]
    %v33 = vld [vmem:[%s1 + $0x18] sm:$0xff]
    %v34 = vld [vmem:[%s1 + $0x20] sm:$0xff]
    %v35 = vld [vmem:[%s1 + $0x28] sm:$0xff]
    %v36 = vld [vmem:[%s1 + $0x30] sm:$0xff]
    %v37 = vld [vmem:[%s1 + $0x38] sm:$0xff]
    %vm38 = vcmask 523264
    %v40 = vsel %vm38, %v29, 0
    %42 = vmatprep.subr.mxu0 0.0
    %43 = vmatpush1.msra.mxu0 %v30
    %44 = vmatprep.subr.mxu0 0.0
    %45 = vmatpush1.msra.mxu0 %v31
    %46 = vmatprep.subr.mxu0 0.0
    %47 = vmatpush1.msra.mxu0 %v32
    %48 = vmatprep.subr.mxu0 0.0
    %49 = vmatpush1.msra.mxu0 %v33
    %50 = vmatprep.subr.mxu0 0.0
    %51 = vmatpush1.msra.mxu0 %v34
    %52 = vmatprep.subr.mxu0 0.0
    %53 = vmatpush1.msra.mxu0 %v35
    %54 = vmatprep.subr.mxu0 0.0
    %55 = vmatpush1.msra.mxu0 %v36
    %56 = vmatprep.subr.mxu0 0.0
    %57 = vmatpush1.msra.mxu0 %v37
    %58 = vmatprep.subr.mxu0 0.0
    %59 = vmatpush1.msra.mxu0 0.0
    %60 = vmatprep.subr.mxu0 0.0
    %61 = vmatpush1.msra.mxu0 0.0
    %62 = vmatprep.subr.mxu0 0.0
    %63 = vmatpush1.msra.mxu0 0.0
    %64 = vmatprep.subr.mxu0 0.0
    %65 = vmatpush1.msra.mxu0 0.0
    %66 = vmatprep.subr.mxu0 0.0
    %67 = vmatpush1.msra.mxu0 0.0
    %68 = vmatprep.subr.mxu0 0.0
    %69 = vmatpush1.msra.mxu0 0.0
    %70 = vmatprep.subr.mxu0 0.0
    %71 = vmatpush1.msra.mxu0 0.0
    %72 = vmatprep.subr.mxu0 0.0
    %73 = vmatpush1.msra.mxu0 0.0
    %74 = vmatprep.subr.mxu0 0.0
    %75 = vmatpush1.msra.mxu0 0.0
    %76 = vmatprep.subr.mxu0 0.0
    %77 = vmatpush1.msra.mxu0 0.0
    %78 = vmatprep.subr.mxu0 0.0
    %79 = vmatpush1.msra.mxu0 0.0
    %80 = vmatprep.subr.mxu0 0.0
    %81 = vmatpush1.msra.mxu0 0.0
    %82 = vmatprep.subr.mxu0 0.0
    %83 = vmatpush1.msra.mxu0 0.0
    %84 = vmatprep.subr.mxu0 0.0
    %85 = vmatpush1.msra.mxu0 0.0
    %86 = vmatprep.subr.mxu0 0.0
    %87 = vmatpush1.msra.mxu0 0.0
    %88 = vmatprep.subr.mxu0 0.0
    %89 = vmatpush1.msra.mxu0 0.0
    %90 = vmatprep.subr.mxu0 0.0
    %91 = vmatpush1.msra.mxu0 0.0
    %92 = vmatprep.subr.mxu0 0.0
    %93 = vmatpush1.msra.mxu0 0.0
    %94 = vmatprep.subr.mxu0 0.0
    %95 = vmatpush1.msra.mxu0 0.0
    %96 = vmatprep.subr.mxu0 0.0
    %97 = vmatpush1.msra.mxu0 0.0
    %98 = vmatprep.subr.mxu0 0.0
    %99 = vmatpush1.msra.mxu0 0.0
    %100 = vmatprep.subr.mxu0 0.0
    %101 = vmatpush1.msra.mxu0 0.0
    %102 = vmatprep.subr.mxu0 0.0
    %103 = vmatpush1.msra.mxu0 0.0
    %104 = vmatprep.subr.mxu0 0.0
    %105 = vmatpush1.msra.mxu0 0.0
    %106 = vmatprep.mubr.f32.mxu0 0.0
    %107 = vmatmul.mubr.f32.gmra.mrb[0].mxu0 %v40
    %v108 = vpop.f32.mrb[0].mxu0
    %v109 = vadd.f32 0.0, %v108
    %v110 = vpop.f32.mrb[0].mxu0
    %111 = vdwg.mxu0
    %v112 = vmul.f32 %v109, %v109
    %vm113 = vcmask 254976
    %v114 = vsel %vm113, %v112, 0.0
    %115 = vadd.xlane.f32.xlu0 %v114
    %v116 = vpop.xlane.xlu0 %115
    %v117 = vrsqrt.pop %v116
    %v118 = vmul.f32 %v116, %v117
    %vm119 = vcmp.eq.f32.partialorder %v116, inf
    %v120 = vsel %vm119, %v116, %v118
    %vm121 = vcmp.eq.f32.partialorder %v116, 0.0
    %v122 = vand.u32 %v116, 2147483648
    %v123 = vsel %vm121, %v122, %v120
    %vm124 = vcmp.gt.f32.partialorder %v123, 1.0
    %v125 = vadd.f32 %v123, 1e-07
    %v126 = vrcp.pop %v125
    %v127 = vmul.f32 1.0, %v126
    %v128 = vsel %vm124, %v127, 1.0
    %v129 = vmul.f32 %v109, %v128
    %v130 = vld [vmem:[%s2] sm:$0xff]
    %v131 = vld [vmem:[%s2 + $0x8] sm:$0xff]
    %v132 = vld [vmem:[%s2 + $0x10] sm:$0xff]
    %v133 = vld [vmem:[%s2 + $0x18] sm:$0xff]
    %v134 = vld [vmem:[%s3] sm:$0x1]
    %v136 = vlaneseq
    %v137 = vshrl.u32 %v136, 7
    %v138 = vsub.s32 0, %v137
    %v139 = vrot.slane %v134, %v138
    %vm141 = vcmask 261120
    %v143 = vsel %vm141, %v129, 0
    %145 = vmatprep.subr.mxu0 0.0
    %146 = vmatpush1.msra.mxu0 %v130
    %147 = vmatprep.subr.mxu0 0.0
    %148 = vmatpush1.msra.mxu0 %v131
    %149 = vmatprep.subr.mxu0 0.0
    %150 = vmatpush1.msra.mxu0 %v132
    %151 = vmatprep.subr.mxu0 0.0
    %152 = vmatpush1.msra.mxu0 %v133
    %153 = vmatprep.subr.mxu0 0.0
    %154 = vmatpush1.msra.mxu0 0.0
    %155 = vmatprep.subr.mxu0 0.0
    %156 = vmatpush1.msra.mxu0 0.0
    %157 = vmatprep.subr.mxu0 0.0
    %158 = vmatpush1.msra.mxu0 0.0
    %159 = vmatprep.subr.mxu0 0.0
    %160 = vmatpush1.msra.mxu0 0.0
    %161 = vmatprep.subr.mxu0 0.0
    %162 = vmatpush1.msra.mxu0 0.0
    %163 = vmatprep.subr.mxu0 0.0
    %164 = vmatpush1.msra.mxu0 0.0
    %165 = vmatprep.subr.mxu0 0.0
    %166 = vmatpush1.msra.mxu0 0.0
    %167 = vmatprep.subr.mxu0 0.0
    %168 = vmatpush1.msra.mxu0 0.0
    %169 = vmatprep.subr.mxu0 0.0
    %170 = vmatpush1.msra.mxu0 0.0
    %171 = vmatprep.subr.mxu0 0.0
    %172 = vmatpush1.msra.mxu0 0.0
    %173 = vmatprep.subr.mxu0 0.0
    %174 = vmatpush1.msra.mxu0 0.0
    %175 = vmatprep.subr.mxu0 0.0
    %176 = vmatpush1.msra.mxu0 0.0
    %177 = vmatprep.subr.mxu0 0.0
    %178 = vmatpush1.msra.mxu0 0.0
    %179 = vmatprep.subr.mxu0 0.0
    %180 = vmatpush1.msra.mxu0 0.0
    %181 = vmatprep.subr.mxu0 0.0
    %182 = vmatpush1.msra.mxu0 0.0
    %183 = vmatprep.subr.mxu0 0.0
    %184 = vmatpush1.msra.mxu0 0.0
    %185 = vmatprep.subr.mxu0 0.0
    %186 = vmatpush1.msra.mxu0 0.0
    %187 = vmatprep.subr.mxu0 0.0
    %188 = vmatpush1.msra.mxu0 0.0
    %189 = vmatprep.subr.mxu0 0.0
    %190 = vmatpush1.msra.mxu0 0.0
    %191 = vmatprep.subr.mxu0 0.0
    %192 = vmatpush1.msra.mxu0 0.0
    %193 = vmatprep.subr.mxu0 0.0
    %194 = vmatpush1.msra.mxu0 0.0
    %195 = vmatprep.subr.mxu0 0.0
    %196 = vmatpush1.msra.mxu0 0.0
    %197 = vmatprep.subr.mxu0 0.0
    %198 = vmatpush1.msra.mxu0 0.0
    %199 = vmatprep.subr.mxu0 0.0
    %200 = vmatpush1.msra.mxu0 0.0
    %201 = vmatprep.subr.mxu0 0.0
    %202 = vmatpush1.msra.mxu0 0.0
    %203 = vmatprep.subr.mxu0 0.0
    %204 = vmatpush1.msra.mxu0 0.0
    %205 = vmatprep.subr.mxu0 0.0
    %206 = vmatpush1.msra.mxu0 0.0
    %207 = vmatprep.subr.mxu0 0.0
    %208 = vmatpush1.msra.mxu0 0.0
    %209 = vmatprep.mubr.f32.mxu0 0.0
    %210 = vmatmul.mubr.f32.gmra.mrb[0].mxu0 %v143
    %v211 = vpop.f32.mrb[0].mxu0
    %v212 = vadd.f32 %v139, %v211
    %v213 = vpop.f32.mrb[0].mxu0
    %214 = vdwg.mxu0
    %v215 = vtanh.pop %v212
    %216 = vst.msk [vmem:[#allocation2] sm:$0x3] %vm113, %v215
    // Predicated region
    $region18: #{tpu_custom_call.1} parent=1 // pred_check
      _
    $region19: #{tpu_custom_call.1} parent=1 // pred_check_branch
      %218 = sbr.rel (0) target = $region21
    $region20: #{tpu_custom_call.1} parent=1 // pred_region
      %s220 = ssub.s32 32, 32
      %221 = vsyncadd [#allocation3], %s220
      %s223 = sshll.u32 [#allocation2], 4
      %s224 = int_to_ptr.vmem [resolvable:$true] %s223
      %226 = dma.vmem_to_hbm [thread:$0]  %s224, 32, %s4, [#allocation3]
    $region21: #{tpu_custom_call.1} parent=1 // pred_fallthru
      _
    // Predicated region
    $region22: #{tpu_custom_call.1} parent=1 // pred_check
      _
    $region23: #{tpu_custom_call.1} parent=1 // pred_check_branch
      %228 = sbr.rel (0) target = $region25
    $region24: #{tpu_custom_call.1} parent=1 // pred_region
      %229 = dma.done [#allocation3], 32
    $region25: #{tpu_custom_call.1} parent=1 // pred_fallthru
      _
    %230 = vsyncpa [#allocation3], 1

</llo_original>
